<compile_context>
chip_gen: v6e
topology: v6e:2x2x1
jax: 0.10.0
libtpu: 0.0.40
codegen_flags: <defaults>
</compile_context>

<pallas_src>
import functools

import jax
import jax.numpy as jnp
from jax import lax
from jax.experimental import pallas as pl
from jax.experimental.pallas import tpu as pltpu


_VMEM_BUDGET_BYTES = 24 * 1024 * 1024   # double-buffered working-set target (fits v7x 64 MiB)
_VMEM_LIMIT_BYTES = 40 * 1024 * 1024    # scoped VMEM limit handed to Mosaic


# ----------------------------------------------------------------------------
# Kernels
# ----------------------------------------------------------------------------
def _lowbias32(x):
    """High-quality 32-bit integer mixing hash (lowbias32) on uint32 arrays."""
    x = x ^ (x >> 16)
    x = x * jnp.uint32(0x7FEB352D)
    x = x ^ (x >> 15)
    x = x * jnp.uint32(0x846CA68B)
    x = x ^ (x >> 16)
    return x


def _linear_dropout_kernel(seed_ref, x_ref, w_ref, b_ref, o_ref, acc_ref, *,
                           apply_dropout, total_cols, compute_dtype):
    """y = x @ W + b, optionally followed by inverted dropout with p=0.5.

    Grid: (M/tm, N/tn, K/tk), K innermost ("arbitrary").
    x_ref: (tm, tk)   w_ref: (tk, tn)   b_ref: (1, tn)   o_ref: (tm, tn)
    acc_ref: (tm, tn) f32 VMEM scratch, resident across the K axis.
    seed_ref: scalar-prefetched int32[1] in SMEM.
    """
    i = pl.program_id(0)
    j = pl.program_id(1)
    k = pl.program_id(2)

    @pl.when(k == 0)
    def _():
        acc_ref[...] = jnp.zeros_like(acc_ref)

    x = x_ref[...]
    w = w_ref[...]
    if compute_dtype is not None:
        x = x.astype(compute_dtype)
        w = w.astype(compute_dtype)
    acc_ref[...] += jnp.dot(x, w, preferred_element_type=jnp.float32)

    @pl.when(k == pl.num_programs(2) - 1)
    def _():
        y = acc_ref[...] + b_ref[...].astype(jnp.float32)          # (tm,tn) + (1,tn)
        if apply_dropout:
            tm, tn = acc_ref.shape
            # Stateless mask: hash the global element index with the seed, then
            # threshold the full 32-bit word (keep prob = 0.5).
            row = lax.broadcasted_iota(jnp.int32, (tm, tn), 0) + i * tm
            col = lax.broadcasted_iota(jnp.int32, (tm, tn), 1) + j * tn
            idx = (row * total_cols + col).astype(jnp.uint32)
            u = _lowbias32(idx ^ seed_ref[0].astype(jnp.uint32))
            keep = u < jnp.uint32(0x80000000)
            y = jnp.where(keep, y * 2.0, 0.0)                       # inverted dropout, 1/(1-p)=2
        o_ref[...] = y.astype(o_ref.dtype)


def _variational_linear_kernel(x_ref, wmu_ref, wnoise_ref, b_ref, o_ref, acc_ref, *,
                               compute_dtype):
    """y = x @ (W_mu + W_noise) + b_sampled, W_noise = exp(0.5*W_logvar)*eps_w precomputed.

    The sampled weight is never materialized in HBM; only the two weight streams
    (mu, noise) are read per K tile and summed in VMEM before hitting the MXU.
    """
    k = pl.program_id(2)

    @pl.when(k == 0)
    def _():
        acc_ref[...] = jnp.zeros_like(acc_ref)

    x = x_ref[...]
    w = wmu_ref[...] + wnoise_ref[...]
    if compute_dtype is not None:
        x = x.astype(compute_dtype)
        w = w.astype(compute_dtype)
    acc_ref[...] += jnp.dot(x, w, preferred_element_type=jnp.float32)

    @pl.when(k == pl.num_programs(2) - 1)
    def _():
        o_ref[...] = (acc_ref[...] + b_ref[...].astype(jnp.float32)).astype(o_ref.dtype)


# ----------------------------------------------------------------------------
# Tiling / padding helpers
# ----------------------------------------------------------------------------
def _round_up(x, m):
    return ((x + m - 1) // m) * m


def _sublane(itemsize):
    return {4: 8, 2: 16, 1: 32}.get(itemsize, 8)


def _pick_tiles(M, N, K, itemsize, n_weight_streams):
    """Largest tiles (<= 512/512/1024) whose double-buffered working set fits the
    VMEM budget; then ensure the two "parallel" grid axes yield >= 2 programs so
    v7x's two TensorCores both get work."""
    sub = _sublane(itemsize)
    tm = min(_round_up(M, sub), 512)
    tn = min(_round_up(N, 128), 512)
    tk = min(_round_up(K, 128), 1024)

    def ws(tm_, tn_, tk_):
        stream = (tm_ * tk_ + n_weight_streams * tk_ * tn_ + tn_ + tm_ * tn_) * itemsize
        return 2 * stream + tm_ * tn_ * 4        # double-buffered streams + f32 acc

    while ws(tm, tn, tk) > _VMEM_BUDGET_BYTES and tk > 128:
        tk = max(128, tk // 2)
    while ws(tm, tn, tk) > _VMEM_BUDGET_BYTES and tn > 128:
        tn = max(128, tn // 2)
    while ws(tm, tn, tk) > _VMEM_BUDGET_BYTES and tm > sub:
        tm = max(sub, _round_up(tm // 2, sub))

    if pl.cdiv(M, tm) * pl.cdiv(N, tn) == 1:
        if tn >= 256:
            tn //= 2
        elif tm >= 2 * sub:
            tm = max(sub, _round_up(tm // 2, sub))
    return tm, tn, tk


def _pad_to(a, shape):
    pads = [(0, t - s) for s, t in zip(a.shape, shape)]
    if any(p[1] for p in pads):
        a = jnp.pad(a, pads)
    return a


# ----------------------------------------------------------------------------
# Wrappers
# ----------------------------------------------------------------------------
def uncertainty_linear_mc_dropout(x, weight, bias, seed, *, apply_dropout=True,
                                  compute_dtype=None):
    """Default branch: Dropout(p=0.5)(x @ weight + bias).

    x: (..., in_features); weight: (in_features, out_features); bias: (out_features,).
    apply_dropout=False gives the plain linear layer (nn.Dropout in eval mode).
    compute_dtype (e.g. jnp.bfloat16) optionally casts the matmul operands; the
    accumulator and epilogue stay f32.
    """
    x2 = x.reshape(-1, x.shape[-1])
    M, K = x2.shape
    N = weight.shape[1]
    itemsize = jnp.dtype(x2.dtype).itemsize

    tm, tn, tk = _pick_tiles(M, N, K, itemsize, n_weight_streams=1)
    Mp, Np, Kp = _round_up(M, tm), _round_up(N, tn), _round_up(K, tk)

    x2p = _pad_to(x2, (Mp, Kp))
    wp = _pad_to(weight, (Kp, Np))
    bp = _pad_to(bias.reshape(1, N), (1, Np))
    seed_arr = jnp.asarray([seed], dtype=jnp.int32)

    if compute_dtype is not None and jnp.dtype(compute_dtype) == x2.dtype:
        compute_dtype = None

    grid = (Mp // tm, Np // tn, Kp // tk)
    kernel = functools.partial(_linear_dropout_kernel, apply_dropout=apply_dropout,
                               total_cols=Np, compute_dtype=compute_dtype)
    cost = pl.CostEstimate(
        flops=2 * Mp * Np * Kp,
        transcendentals=0,
        bytes_accessed=(Mp * Kp + Kp * Np + Np + Mp * Np) * itemsize)

    out = pl.pallas_call(
        kernel,
        out_shape=jax.ShapeDtypeStruct((Mp, Np), x.dtype),
        grid_spec=pltpu.PrefetchScalarGridSpec(
            num_scalar_prefetch=1,                       # seed -> SMEM
            grid=grid,
            in_specs=[
                pl.BlockSpec((tm, tk), lambda i, j, k, seed: (i, k)),
                pl.BlockSpec((tk, tn), lambda i, j, k, seed: (k, j)),
                pl.BlockSpec((1, tn), lambda i, j, k, seed: (0, j)),
            ],
            out_specs=pl.BlockSpec((tm, tn), lambda i, j, k, seed: (i, j)),
            scratch_shapes=[pltpu.VMEM((tm, tn), jnp.float32)],
        ),
        compiler_params=pltpu.CompilerParams(
            dimension_semantics=("parallel", "parallel", "arbitrary"),
            vmem_limit_bytes=_VMEM_LIMIT_BYTES),
        cost_estimate=cost,
    )(seed_arr, x2p, wp, bp)
    return out[:M, :N].reshape(*x.shape[:-1], N)


def uncertainty_linear_variational(x, w_mu, w_logvar, eps_w, b_mu, b_logvar, eps_b, *,
                                   compute_dtype=None):
    """'variational' training branch. Noise (eps_w, eps_b) is supplied by the caller,
    mirroring torch.randn_like's external RNG. (Eval mode == eps_w = eps_b = 0.)"""
    x2 = x.reshape(-1, x.shape[-1])
    M, K = x2.shape
    N = w_mu.shape[1]
    itemsize = jnp.dtype(x2.dtype).itemsize

    # One-shot O(K*N) reparameterization precompute in f32 (cheap XLA elementwise):
    # cuts the in-kernel weight HBM streams from 3 to 2 and removes exp/mul from the
    # O((M/tm)*K*N) inner loop. The sampled weight itself is never materialized.
    w_noise = (jnp.exp(0.5 * w_logvar.astype(jnp.float32))
               * eps_w.astype(jnp.float32)).astype(w_mu.dtype)
    b_sampled = (b_mu.astype(jnp.float32)
                 + jnp.exp(0.5 * b_logvar.astype(jnp.float32)) * eps_b.astype(jnp.float32))

    tm, tn, tk = _pick_tiles(M, N, K, itemsize, n_weight_streams=2)
    Mp, Np, Kp = _round_up(M, tm), _round_up(N, tn), _round_up(K, tk)

    x2p = _pad_to(x2, (Mp, Kp))
    wmu = _pad_to(w_mu, (Kp, Np))
    wns = _pad_to(w_noise, (Kp, Np))
    bp = _pad_to(b_sampled.reshape(1, N), (1, Np))

    if compute_dtype is not None and jnp.dtype(compute_dtype) == x2.dtype:
        compute_dtype = None

    grid = (Mp // tm, Np // tn, Kp // tk)
    kernel = functools.partial(_variational_linear_kernel, compute_dtype=compute_dtype)
    w_spec = pl.BlockSpec((tk, tn), lambda i, j, k: (k, j))
    cost = pl.CostEstimate(
        flops=2 * Mp * Np * Kp,
        transcendentals=0,
        bytes_accessed=(Mp * Kp + 2 * Kp * Np + Mp * Np) * itemsize + Np * 4)

    out = pl.pallas_call(
        kernel,
        out_shape=jax.ShapeDtypeStruct((Mp, Np), x.dtype),
        grid_spec=pltpu.PrefetchScalarGridSpec(
            num_scalar_prefetch=0,
            grid=grid,
            in_specs=[
                pl.BlockSpec((tm, tk), lambda i, j, k: (i, k)),
                w_spec, w_spec,                           # w_mu, w_noise
                pl.BlockSpec((1, tn), lambda i, j, k: (0, j)),
            ],
            out_specs=pl.BlockSpec((tm, tn), lambda i, j, k: (i, j)),
            scratch_shapes=[pltpu.VMEM((tm, tn), jnp.float32)],
        ),
        compiler_params=pltpu.CompilerParams(
            dimension_semantics=("parallel", "parallel", "arbitrary"),
            vmem_limit_bytes=_VMEM_LIMIT_BYTES),
        cost_estimate=cost,
    )(x2p, wmu, wns, bp)
    return out[:M, :N].reshape(*x.shape[:-1], N)


# TODO(synk): get_kl_loss is a plain scalar reduction over the variational params
# (not part of forward); it is left to ordinary jnp ops outside the kernel.


# ----------------------------------------------------------------------------
# Self-test
# ----------------------------------------------------------------------------
if __name__ == "__main__":
    B, T, IN, OUT = 2, 8, 128, 128     # small, lane-dense shapes

    key = jax.random.PRNGKey(0)
    kx, kw, kb, kwm, kwl, kew, keb = jax.random.split(key, 7)

    x = jax.random.normal(kx, (B, T, IN), dtype=jnp.float32)

    # --------- default branch: mc_dropout (Linear + Dropout(0.5)) ---------
    W = 0.1 * jax.random.normal(kw, (IN, OUT), dtype=jnp.float32)   # = linear.weight.T
    b = 0.1 * jax.random.normal(kb, (OUT,), dtype=jnp.float32)

    y_mc = uncertainty_linear_mc_dropout(x, W, b, seed=0, apply_dropout=True)
    y_mc = jax.block_until_ready(y_mc)

    lin_ref = (x.reshape(-1, IN) @ W + b).reshape(B, T, OUT)
    # Every output element must be either dropped (0) or kept & scaled by 1/(1-p)=2.
    is_zero = jnp.abs(y_mc) < 1e-5
    is_kept = jnp.abs(y_mc - 2.0 * lin_ref) < 1e-4
    assert bool(jnp.all(is_zero | is_kept)), "mc_dropout: values not in {0, 2*linear(x)}"
    keep_frac = float(1.0 - jnp.mean(is_zero.astype(jnp.float32)))
    assert 0.3 < keep_frac < 0.7, f"mc_dropout keep fraction {keep_frac:.3f} far from 0.5"

    # Deterministic (no-dropout) path of the same kernel for an exact check.
    y_lin = uncertainty_linear_mc_dropout(x, W, b, seed=0, apply_dropout=False)
    y_lin = jax.block_until_ready(y_lin)
    assert jnp.allclose(y_lin, lin_ref, atol=1e-4, rtol=1e-4), "linear mismatch"

    # bf16-fed MXU path (f32 accumulator) — looser tolerance.
    y_bf16 = uncertainty_linear_mc_dropout(x, W, b, seed=0, apply_dropout=False,
                                           compute_dtype=jnp.bfloat16)
    y_bf16 = jax.block_until_ready(y_bf16)
    assert jnp.allclose(y_bf16, lin_ref, atol=5e-2, rtol=5e-2), "bf16 linear mismatch"

    # --------- 'variational' branch (training=True) ---------
    w_mu = 0.1 * jax.random.normal(kwm, (IN, OUT), dtype=jnp.float32)
    w_logvar = 0.1 * jax.random.normal(kwl, (IN, OUT), dtype=jnp.float32)
    b_mu = jnp.zeros((OUT,), dtype=jnp.float32)
    b_logvar = jnp.zeros((OUT,), dtype=jnp.float32)
    eps_w = jax.random.normal(kew, (IN, OUT), dtype=jnp.float32)
    eps_b = jax.random.normal(keb, (OUT,), dtype=jnp.float32)

    y_var = uncertainty_linear_variational(x, w_mu, w_logvar, eps_w,
                                           b_mu, b_logvar, eps_b)
    y_var = jax.block_until_ready(y_var)

    w_samp = w_mu + jnp.exp(0.5 * w_logvar) * eps_w
    b_samp = b_mu + jnp.exp(0.5 * b_logvar) * eps_b
    ref_var = (x.reshape(-1, IN) @ w_samp + b_samp).reshape(B, T, OUT)
    assert jnp.allclose(y_var, ref_var, atol=1e-4, rtol=1e-4), "variational mismatch"

    print("KERNEL_OK")
</pallas_src>

<mosaic_0001>
module attributes {stable_mosaic.version = 11 : i64} {
  func.func @_linear_dropout_kernel(%arg0: i32, %arg1: i32, %arg2: i32, %arg3: memref<1xi32, #tpu.memory_space<smem>>, %arg4: memref<8x128xf32, #tpu.memory_space<vmem>>, %arg5: memref<128x128xf32, #tpu.memory_space<vmem>>, %arg6: memref<1x128xf32, #tpu.memory_space<vmem>>, %arg7: memref<8x128xf32, #tpu.memory_space<vmem>>, %arg8: memref<8x128xf32, #tpu.memory_space<vmem>>) attributes {dimension_semantics = [#tpu.dimension_semantics<parallel>, #tpu.dimension_semantics<parallel>, #tpu.dimension_semantics<arbitrary>], iteration_bounds = array<i64: 2, 1, 1>, scalar_prefetch = 1 : i64, scratch_operands = 1 : i64, tpu.core_type = #tpu.core_type<tc>, window_params = [{transform_indices = @transform_0, window_bounds = array<i64: 8, 128>}, {transform_indices = @transform_1, window_bounds = array<i64: 128, 128>}, {transform_indices = @transform_2, window_bounds = array<i64: 1, 128>}, {transform_indices = @transform_3, window_bounds = array<i64: 8, 128>}]} {
    %c0_i32 = arith.constant 0 : i32
    %0 = arith.cmpi eq, %arg2, %c0_i32 : i32
    %1 = arith.extui %0 : i1 to i32
    %c0_i32_0 = arith.constant 0 : i32
    %2 = arith.cmpi ne, %1, %c0_i32_0 : i32
    scf.if %2 {
      %cst_10 = arith.constant 0.000000e+00 : f32
      %12 = vector.broadcast %cst_10 : f32 to vector<8x128xf32>
      %c0_11 = arith.constant 0 : index
      %c0_12 = arith.constant 0 : index
      %13 = vector.load %arg8[%c0_11, %c0_12] : memref<8x128xf32, #tpu.memory_space<vmem>>, vector<8x128xf32>
      tpu.vector_store %arg8[%c0_11, %c0_12], %12 {strides = array<i32>} : memref<8x128xf32, #tpu.memory_space<vmem>>, vector<8x128xf32>,
    } else {
    }
    %c0 = arith.constant 0 : index
    %c0_1 = arith.constant 0 : index
    %3 = vector.load %arg4[%c0, %c0_1] : memref<8x128xf32, #tpu.memory_space<vmem>>, vector<8x128xf32>
    %c0_2 = arith.constant 0 : index
    %c0_3 = arith.constant 0 : index
    %4 = vector.load %arg5[%c0_2, %c0_3] : memref<128x128xf32, #tpu.memory_space<vmem>>, vector<128x128xf32>
    %c0_4 = arith.constant 0 : index
    %c0_5 = arith.constant 0 : index
    %5 = vector.load %arg8[%c0_4, %c0_5] : memref<8x128xf32, #tpu.memory_space<vmem>>, vector<8x128xf32>
    %cst = arith.constant dense<0.000000e+00> : vector<8x128xf32>
    %6 = tpu.matmul %3, %4, %cst {dimension_numbers = #tpu.dot_dimension_numbers<[1], [0], [0], [1], [0, 0, 1, 1], [], []>} : vector<8x128xf32>, vector<128x128xf32>, vector<8x128xf32> -> vector<8x128xf32>
    %7 = arith.addf %5, %6 : vector<8x128xf32>
    %c0_6 = arith.constant 0 : index
    %c0_7 = arith.constant 0 : index
    %8 = vector.load %arg8[%c0_6, %c0_7] : memref<8x128xf32, #tpu.memory_space<vmem>>, vector<8x128xf32>
    tpu.vector_store %arg8[%c0_6, %c0_7], %7 {strides = array<i32>} : memref<8x128xf32, #tpu.memory_space<vmem>>, vector<8x128xf32>,
    %c0_i32_8 = arith.constant 0 : i32
    %9 = arith.cmpi eq, %arg2, %c0_i32_8 : i32
    %10 = arith.extui %9 : i1 to i32
    %c0_i32_9 = arith.constant 0 : i32
    %11 = arith.cmpi ne, %10, %c0_i32_9 : i32
    scf.if %11 {
      %c0_10 = arith.constant 0 : index
      %c0_11 = arith.constant 0 : index
      %12 = vector.load %arg8[%c0_10, %c0_11] : memref<8x128xf32, #tpu.memory_space<vmem>>, vector<8x128xf32>
      %c0_12 = arith.constant 0 : index
      %c0_13 = arith.constant 0 : index
      %13 = vector.load %arg6[%c0_12, %c0_13] : memref<1x128xf32, #tpu.memory_space<vmem>>, vector<1x128xf32>
      %14 = vector.broadcast %13 : vector<1x128xf32> to vector<8x128xf32>
      %15 = arith.addf %12, %14 : vector<8x128xf32>
      %16 = tpu.iota {dimensions = array<i32: 0>} : vector<8x128xi32>
      %c8_i32 = arith.constant 8 : i32
      %17 = arith.muli %arg0, %c8_i32 : i32
      %18 = vector.broadcast %17 : i32 to vector<8x128xi32>
      %19 = arith.addi %16, %18 : vector<8x128xi32>
      %20 = tpu.iota {dimensions = array<i32: 1>} : vector<8x128xi32>
      %c128_i32 = arith.constant 128 : i32
      %21 = arith.muli %arg1, %c128_i32 : i32
      %22 = vector.broadcast %21 : i32 to vector<8x128xi32>
      %23 = arith.addi %20, %22 : vector<8x128xi32>
      %c128_i32_14 = arith.constant 128 : i32
      %24 = vector.broadcast %c128_i32_14 : i32 to vector<8x128xi32>
      %25 = arith.muli %19, %24 : vector<8x128xi32>
      %26 = arith.addi %25, %23 : vector<8x128xi32>
      %c0_15 = arith.constant 0 : index
      %27 = memref.load %arg3[%c0_15] : memref<1xi32, #tpu.memory_space<smem>>
      %28 = vector.broadcast %27 : i32 to vector<8x128xi32>
      %29 = arith.xori %26, %28 : vector<8x128xi32>
      %c16_i32 = arith.constant 16 : i32
      %30 = vector.broadcast %c16_i32 : i32 to vector<8x128xi32>
      %31 = arith.shrui %29, %30 : vector<8x128xi32>
      %32 = arith.xori %29, %31 : vector<8x128xi32>
      %c2146121005_i32 = arith.constant 2146121005 : i32
      %33 = vector.broadcast %c2146121005_i32 : i32 to vector<8x128xi32>
      %34 = arith.muli %32, %33 : vector<8x128xi32>
      %c15_i32 = arith.constant 15 : i32
      %35 = vector.broadcast %c15_i32 : i32 to vector<8x128xi32>
      %36 = arith.shrui %34, %35 : vector<8x128xi32>
      %37 = arith.xori %34, %36 : vector<8x128xi32>
      %c-2073254261_i32 = arith.constant -2073254261 : i32
      %38 = vector.broadcast %c-2073254261_i32 : i32 to vector<8x128xi32>
      %39 = arith.muli %37, %38 : vector<8x128xi32>
      %c16_i32_16 = arith.constant 16 : i32
      %40 = vector.broadcast %c16_i32_16 : i32 to vector<8x128xi32>
      %41 = arith.shrui %39, %40 : vector<8x128xi32>
      %42 = arith.xori %39, %41 : vector<8x128xi32>
      %c-2147483648_i32 = arith.constant -2147483648 : i32
      %43 = vector.broadcast %c-2147483648_i32 : i32 to vector<8x128xi32>
      %44 = arith.cmpi ult, %42, %43 : vector<8x128xi32>
      %cst_17 = arith.constant 2.000000e+00 : f32
      %45 = vector.broadcast %cst_17 : f32 to vector<8x128xf32>
      %46 = arith.mulf %15, %45 : vector<8x128xf32>
      %cst_18 = arith.constant 0.000000e+00 : f32
      %47 = vector.broadcast %cst_18 : f32 to vector<8x128xf32>
      %48 = arith.select %44, %46, %47 : vector<8x128xi1>, vector<8x128xf32>
      %c0_19 = arith.constant 0 : index
      %c0_20 = arith.constant 0 : index
      %49 = vector.load %arg7[%c0_19, %c0_20] : memref<8x128xf32, #tpu.memory_space<vmem>>, vector<8x128xf32>
      tpu.vector_store %arg7[%c0_19, %c0_20], %48 {strides = array<i32>} : memref<8x128xf32, #tpu.memory_space<vmem>>, vector<8x128xf32>,
    } else {
    }
    return
  }
  func.func @transform_0(%arg0: i32, %arg1: i32, %arg2: i32, %arg3: memref<1xi32, #tpu.memory_space<smem>>) -> (i32, i32) {
    %c0_i32 = arith.constant 0 : i32
    return %arg0, %arg2 : i32, i32
  }
  func.func @transform_1(%arg0: i32, %arg1: i32, %arg2: i32, %arg3: memref<1xi32, #tpu.memory_space<smem>>) -> (i32, i32) {
    %c0_i32 = arith.constant 0 : i32
    return %arg2, %arg1 : i32, i32
  }
  func.func @transform_2(%arg0: i32, %arg1: i32, %arg2: i32, %arg3: memref<1xi32, #tpu.memory_space<smem>>) -> (i32, i32) {
    %c0_i32 = arith.constant 0 : i32
    %c0_i32_0 = arith.constant 0 : i32
    return %c0_i32, %arg1 : i32, i32
  }
  func.func @transform_3(%arg0: i32, %arg1: i32, %arg2: i32, %arg3: memref<1xi32, #tpu.memory_space<smem>>) -> (i32, i32) {
    %c0_i32 = arith.constant 0 : i32
    return %arg0, %arg1 : i32, i32
  }
}

</mosaic_0001>

<llo_original>
// kernel: tpu_custom_call.1
$region0: #{tpu_custom_call.1}
  #allocation0 [shape = 'u32[]', space=smem, size = 0x4, offset = 0x4, fixed_abs, tag = 'smem constant byte address 0x4 - core index']
  #allocation1 [shape = 'u32[144,128]{1,0:T(1,128)}', space=vmem, size = 0x12000, scoped, tag = 'internal scratch']
  #allocation2 [shape = 'f32[8,128]{1,0:T(8,128)}', space=vmem, size = 0x1000, scoped, tag = 'scratch operand']
  #allocation3 [shape = 's32[1]{0}', space=sflag, size = 0x4, scoped, tag = 'scoped memory for tpu_custom_call.1']
  #allocation4 [shape = 's32[1]{0:T(128)S(6)}', space=smem, size = 0x200, scoped, tag = 'prefetched SMEM operand 0']
  %s0 = inlined_call_operand.<no memory space> [shape: s32[1], index: 0, kind: input, shape index: {}]
  %s1 = inlined_call_operand.hbm [shape: f32[16,128], index: 1, kind: input, shape index: {}]
  %s2 = inlined_call_operand.hbm [shape: f32[128,128], index: 2, kind: input, shape index: {}]
  %s3 = inlined_call_operand.vmem [shape: f32[1,128], index: 3, kind: input, shape index: {}]
  %s4 = inlined_call_operand.hbm [shape: f32[16,128], index: 4, kind: output, shape index: {}]
  %s5 = sld [smem:[#allocation0]]
  $region61: #{tpu_custom_call.1} parent=0
    _
  %s7 = ssub.s32 1, %s5
  %s8 = scalar_select 0, %s7, %s5
  %9 = sst [smem:[#allocation4]] %s0
  $region1: #{tpu_custom_call.1} parent=0
    #allocation5 [shape = 'u8[8192]{0}', space=vmem, size = 0x2000, scoped, tag = 'input window, operand 1']
    #allocation6 [shape = 's32[2]{0}', space=sflag, size = 0x8, scoped, tag = 'scoped memory for tpu_custom_call.1']
    #allocation7 [shape = 's32[2]{0}', space=sflag, size = 0x8, scoped, tag = 'scoped memory for tpu_custom_call.1']
    #allocation8 [shape = 'u8[65536]{0}', space=vmem, size = 0x10000, scoped, tag = 'input window, operand 2, single buffered']
    #allocation9 [shape = 's32[1]{0}', space=sflag, size = 0x4, scoped, tag = 'scoped memory for tpu_custom_call.1']
    #allocation10 [shape = 'u8[8192]{0}', space=vmem, size = 0x2000, scoped, tag = 'output window, operand 0']
    %10 = vsyncpa [#allocation6], 0
    %s11 = scalar_lea.sflag [#allocation6], 1
    %12 = vsyncpa %s11, 0
    %13 = vsyncpa [#allocation9], 0
    %14 = vsyncpa [#allocation7], 0
    %s15 = scalar_lea.sflag [#allocation7], 1
    %16 = vsyncpa %s15, 0
    loop: start=0, step=1, limit=4
    $region2: #{tpu_custom_call.1} parent=1 // loop_pre_header
      _
    $region3: #{tpu_custom_call.1} parent=1 // loop_header
      %s18 = sphi 0, %s22
      %p19 = scmp.ge.s32.totalorder %s18, 4
      %s25 = sphi 0, %s44
      %s26 = sphi 0, %s40
      %s27 = sphi 0, %s36
      %s28 = sphi 0, %s25
      %s29 = sphi 0, %s26
      %s30 = sphi 0, %s27
      %s31 = sphi 0, %s28
      %s32 = sphi 0, %s29
      %s33 = sphi 0, %s30
      %s49 = sphi 0, %s51
      %s52 = sphi 0, %s49
      %s53 = sphi 0, %s52
      %s69 = sphi 0, %s53
      %s77 = sphi 0, %s79
      %s80 = sphi 0, %s77
      %s81 = sphi 0, %s80
      %s97 = sphi 0, %s81
      %s103 = sphi 0, %s105
      %s106 = sphi 0, %s103
      %s107 = sphi 0, %s106
      %s123 = sphi 0, %s107
      %s131 = sphi 0, %s133
      %s134 = sphi 0, %s131
      %s135 = sphi 0, %s134
      %s151 = sphi 0, %s135
    $region4: #{tpu_custom_call.1} parent=1 // loop_header_branch
      %21 = sbr.rel (%p19) target = $region8
    $region5: #{tpu_custom_call.1} parent=1 // loop_body
      %s23 = ssub.s32 %s18, 1
      %s24 = ssub.s32 %s18, 2
      %s34 = sadd.s32 1, %s27
      %p35 = scmp.ge.s32.totalorder %s34, 1
      %s36 = scalar_select %p35, 0, %s34
      %s37 = sadd.s32 1, %s26
      %s38 = scalar_select %p35, %s37, %s26
      %p39 = scmp.ge.s32.totalorder %s38, 1
      %s40 = scalar_select %p39, 0, %s38
      %s41 = sadd.s32 1, %s25
      %s42 = scalar_select %p39, %s41, %s25
      %p43 = scmp.ge.s32.totalorder %s42, 2
      %s44 = scalar_select %p43, 0, %s42
      %s45 = ssub.s32 %s25, %s44
      %s46 = ssub.s32 %s27, %s36
      %s47 = sor.u32 %s45, %s46
      %p48 = scmp.eq.s32.totalorder %s47, 0
      %s50 = sadd.s32 %s49, 1
      %s51 = scalar_select %p48, %s49, %s50
      %p54 = pneg %p48
      %p55 = scmp.eq.s32.totalorder %s18, 1
      %p56 = por %p54, %p55
      %p57 = scmp.ne.s32.totalorder %s49, %s52
      %p58 = scmp.eq.s32.totalorder %s18, 0
      %p59 = por %p57, %p58
      %p60 = scmp.ne.s32.totalorder %s49, %s52
      %p61 = scmp.eq.s32.totalorder %s23, 1
      %p62 = por %p60, %p61
      %p63 = scmp.ne.s32.totalorder %s52, %s53
      %p64 = scmp.eq.s32.totalorder %s23, 0
      %p65 = por %p63, %p64
      %p66 = scmp.ne.s32.totalorder %s52, %s53
      %p67 = scmp.eq.s32.totalorder %s24, 1
      %p68 = por %p66, %p67
      %p70 = scmp.ne.s32.totalorder %s53, %s69
      %p71 = scmp.eq.s32.totalorder %s24, 0
      %p72 = por %p70, %p71
      %s73 = ssub.s32 %s27, %s36
      %s74 = ssub.s32 %s26, %s40
      %s75 = sor.u32 %s73, %s74
      %p76 = scmp.eq.s32.totalorder %s75, 0
      %s78 = sadd.s32 %s77, 1
      %s79 = scalar_select %p76, %s77, %s78
      %p82 = pneg %p76
      %p83 = scmp.eq.s32.totalorder %s18, 1
      %p84 = por %p82, %p83
      %p85 = scmp.ne.s32.totalorder %s77, %s80
      %p86 = scmp.eq.s32.totalorder %s18, 0
      %p87 = por %p85, %p86
      %p88 = scmp.ne.s32.totalorder %s77, %s80
      %p89 = scmp.eq.s32.totalorder %s23, 1
      %p90 = por %p88, %p89
      %p91 = scmp.ne.s32.totalorder %s80, %s81
      %p92 = scmp.eq.s32.totalorder %s23, 0
      %p93 = por %p91, %p92
      %p94 = scmp.ne.s32.totalorder %s80, %s81
      %p95 = scmp.eq.s32.totalorder %s24, 1
      %p96 = por %p94, %p95
      %p98 = scmp.ne.s32.totalorder %s81, %s97
      %p99 = scmp.eq.s32.totalorder %s24, 0
      %p100 = por %p98, %p99
      %s101 = ssub.s32 %s26, %s40
      %p102 = scmp.eq.s32.totalorder %s101, 0
      %s104 = sadd.s32 %s103, 1
      %s105 = scalar_select %p102, %s103, %s104
      %p108 = pneg %p102
      %p109 = scmp.eq.s32.totalorder %s18, 1
      %p110 = por %p108, %p109
      %p111 = scmp.ne.s32.totalorder %s103, %s106
      %p112 = scmp.eq.s32.totalorder %s18, 0
      %p113 = por %p111, %p112
      %p114 = scmp.ne.s32.totalorder %s103, %s106
      %p115 = scmp.eq.s32.totalorder %s23, 1
      %p116 = por %p114, %p115
      %p117 = scmp.ne.s32.totalorder %s106, %s107
      %p118 = scmp.eq.s32.totalorder %s23, 0
      %p119 = por %p117, %p118
      %p120 = scmp.ne.s32.totalorder %s106, %s107
      %p121 = scmp.eq.s32.totalorder %s24, 1
      %p122 = por %p120, %p121
      %p124 = scmp.ne.s32.totalorder %s107, %s123
      %p125 = scmp.eq.s32.totalorder %s24, 0
      %p126 = por %p124, %p125
      %s127 = ssub.s32 %s25, %s44
      %s128 = ssub.s32 %s26, %s40
      %s129 = sor.u32 %s127, %s128
      %p130 = scmp.eq.s32.totalorder %s129, 0
      %s132 = sadd.s32 %s131, 1
      %s133 = scalar_select %p130, %s131, %s132
      %p136 = pneg %p130
      %p137 = scmp.eq.s32.totalorder %s18, 1
      %p138 = por %p136, %p137
      %p139 = scmp.ne.s32.totalorder %s131, %s134
      %p140 = scmp.eq.s32.totalorder %s18, 0
      %p141 = por %p139, %p140
      %p142 = scmp.ne.s32.totalorder %s131, %s134
      %p143 = scmp.eq.s32.totalorder %s23, 1
      %p144 = por %p142, %p143
      %p145 = scmp.ne.s32.totalorder %s134, %s135
      %p146 = scmp.eq.s32.totalorder %s23, 0
      %p147 = por %p145, %p146
      %p148 = scmp.ne.s32.totalorder %s134, %s135
      %p149 = scmp.eq.s32.totalorder %s24, 1
      %p150 = por %p148, %p149
      %p152 = scmp.ne.s32.totalorder %s135, %s151
      %p153 = scmp.eq.s32.totalorder %s24, 0
      %p154 = por %p152, %p153
      %p155 = scmp.le.s32.totalorder 1, %s18
      %p156 = scmp.lt.s32.totalorder %s18, 3
      %p157 = pnand %p155, %p156
      %p158 = pneg %p157
      // Predicated region
      $region9: #{tpu_custom_call.1} parent=5 // pred_check
        _
      $region10: #{tpu_custom_call.1} parent=5 // pred_check_branch
        %160 = sbr.rel (%p157) target = $region12
      $region11: #{tpu_custom_call.1} parent=5 // pred_region
        %s161 = ssub.s32 %s18, 1
        // Predicated region
        $region13: #{tpu_custom_call.1} parent=11 // pred_check
          %p162 = pneg %p93
        $region14: #{tpu_custom_call.1} parent=11 // pred_check_branch
          %164 = sbr.rel (%p162) target = $region16
        $region15: #{tpu_custom_call.1} parent=11 // pred_region
          %s165 = smul.u32 16, %s30
          %s167 = ssub.s32 2048, 2048
          %168 = vsyncadd [#allocation9], %s167
          %s169 = sadd.s32 %s29, %s165
          %s170 = smul.addr %s169, 128
          %s171 = scalar_lea.hbm %s2, %s170
          %s172 = sshll.u32 [#allocation8], 4
          %s173 = int_to_ptr.vmem [resolvable:$true] %s172
          %178 = dma.hbm_to_vmem [thread:$0]  %s171, 2048, %s173, [#allocation9], 128, 128, 8
        $region16: #{tpu_custom_call.1} parent=11 // pred_fallthru
          _
        // Predicated region
        $region17: #{tpu_custom_call.1} parent=11 // pred_check
          %p179 = pneg %p119
        $region18: #{tpu_custom_call.1} parent=11 // pred_check_branch
          %181 = sbr.rel (%p179) target = $region20
        $region19: #{tpu_custom_call.1} parent=11 // pred_region
          %p182 = scmp.lt.s32.totalorder %s29, 0
          %s183 = scalar_select %p182, %s29, 0
          %s184 = scalar_lea.vmem %s3, %s183
        $region20: #{tpu_custom_call.1} parent=11 // pred_fallthru
          _
      $region12: #{tpu_custom_call.1} parent=5 // pred_fallthru
        _
      %p185 = scmp.lt.s32.totalorder %s18, 2
      // Predicated region
      $region21: #{tpu_custom_call.1} parent=5 // pred_check
        %p186 = pneg %p185
      $region22: #{tpu_custom_call.1} parent=5 // pred_check_branch
        %188 = sbr.rel (%p186) target = $region24
      $region23: #{tpu_custom_call.1} parent=5 // pred_region
        // Predicated region
        $region25: #{tpu_custom_call.1} parent=23 // pred_check
          %p189 = pneg %p59
        $region26: #{tpu_custom_call.1} parent=23 // pred_check_branch
          %191 = sbr.rel (%p189) target = $region28
        $region27: #{tpu_custom_call.1} parent=23 // pred_region
          %s192 = sand.u32 %s49, 1
          %s193 = scalar_lea.sflag [#allocation6], %s192
          %s194 = sand.u32 %s49, 1
          %s195 = smul.addr %s194, 8
          %s196 = scalar_lea.vmem [#allocation5], %s195
          %s198 = ssub.s32 128, 128
          %199 = vsyncadd %s193, %s198
          %s200 = sadd.s32 %s27, %s25
          %s201 = smul.addr %s200, 128
          %s202 = scalar_lea.hbm %s1, %s201
          %s204 = sshll.u32 %s196, 4
          %s205 = int_to_ptr.vmem [resolvable:$true] %s204
          %207 = dma.hbm_to_vmem [thread:$0]  %s202, 128, %s205, %s193
        $region28: #{tpu_custom_call.1} parent=23 // pred_fallthru
          _
      $region24: #{tpu_custom_call.1} parent=5 // pred_fallthru
        _
      %p208 = scmp.le.s32.totalorder 1, %s18
      %p209 = scmp.lt.s32.totalorder %s18, 3
      %p210 = pnand %p208, %p209
      %p211 = pneg %p210
      // Predicated region
      $region29: #{tpu_custom_call.1} parent=5 // pred_check
        _
      $region30: #{tpu_custom_call.1} parent=5 // pred_check_branch
        %213 = sbr.rel (%p210) target = $region32
      $region31: #{tpu_custom_call.1} parent=5 // pred_region
        %s214 = ssub.s32 %s18, 1
        %s215 = sand.u32 %s52, 1
        %s216 = scalar_lea.sflag [#allocation6], %s215
        %s217 = sand.u32 %s52, 1
        %s218 = smul.addr %s217, 8
        %s219 = scalar_lea.vmem [#allocation5], %s218
        // Predicated region
        $region33: #{tpu_custom_call.1} parent=31 // pred_check
          %p220 = pneg %p65
        $region34: #{tpu_custom_call.1} parent=31 // pred_check_branch
          %222 = sbr.rel (%p220) target = $region36
        $region35: #{tpu_custom_call.1} parent=31 // pred_region
          %223 = dma.done %s216, 128
        $region36: #{tpu_custom_call.1} parent=31 // pred_fallthru
          _
        // Predicated region
        $region37: #{tpu_custom_call.1} parent=31 // pred_check
          %p224 = pneg %p93
        $region38: #{tpu_custom_call.1} parent=31 // pred_check_branch
          %226 = sbr.rel (%p224) target = $region40
        $region39: #{tpu_custom_call.1} parent=31 // pred_region
          %227 = dma.done [#allocation9], 2048
        $region40: #{tpu_custom_call.1} parent=31 // pred_fallthru
          _
        %s228 = sand.u32 %s52, 1
        %s229 = scalar_lea.sflag [#allocation6], %s228
        %s230 = sand.u32 %s52, 1
        %s231 = smul.addr %s230, 8
        %s232 = scalar_lea.vmem [#allocation5], %s231
        %p233 = pneg %p65
        %p234 = pneg %p62
        %p235 = pneg %p93
        %p236 = pneg %p90
        %p237 = scmp.lt.s32.totalorder %s29, 0
        %s238 = scalar_select %p237, %s29, 0
        %s239 = scalar_lea.vmem %s3, %s238
        %p240 = pneg %p119
        %p241 = pneg %p116
        %p242 = pneg %p147
        %p243 = pneg %p144
        %s244 = sand.u32 %s134, 1
        %s245 = scalar_lea.sflag [#allocation7], %s244
        %s246 = sand.u32 %s134, 1
        %s247 = smul.addr %s246, 8
        %s248 = scalar_lea.vmem [#allocation10], %s247
        %s249 = smul.u32 16, %s30
        %p250 = scmp.lt.s32.totalorder %s29, 0
        %s251 = scalar_select %p250, %s29, 0
        %s252 = scalar_lea.vmem %s3, %s251
        %p253 = scmp.eq.s32.totalorder %s30, 0
        // Predicated region
        $region41: #{tpu_custom_call.1} parent=31 // pred_check
          %p254 = pneg %p253
        $region42: #{tpu_custom_call.1} parent=31 // pred_check_branch
          %256 = sbr.rel (%p254) target = $region44
        $region43: #{tpu_custom_call.1} parent=31 // pred_region
          %257 = vst [vmem:[#allocation2] sm:$0xff] 0.0
        $region44: #{tpu_custom_call.1} parent=31 // pred_fallthru
          _
        %v258 = vld [vmem:[%s219] sm:$0xff]
        %v259 = vld [vmem:[#allocation8] sm:$0xff]
        %v260 = vld [vmem:[#allocation8 + $0x8] sm:$0xff]
        %v261 = vld [vmem:[#allocation8 + $0x10] sm:$0xff]
        %v262 = vld [vmem:[#allocation8 + $0x18] sm:$0xff]
        %v263 = vld [vmem:[#allocation8 + $0x20] sm:$0xff]
        %v264 = vld [vmem:[#allocation8 + $0x28] sm:$0xff]
        %v265 = vld [vmem:[#allocation8 + $0x30] sm:$0xff]
        %v266 = vld [vmem:[#allocation8 + $0x38] sm:$0xff]
        %v267 = vld [vmem:[#allocation8 + $0x40] sm:$0xff]
        %v268 = vld [vmem:[#allocation8 + $0x48] sm:$0xff]
        %v269 = vld [vmem:[#allocation8 + $0x50] sm:$0xff]
        %v270 = vld [vmem:[#allocation8 + $0x58] sm:$0xff]
        %v271 = vld [vmem:[#allocation8 + $0x60] sm:$0xff]
        %v272 = vld [vmem:[#allocation8 + $0x68] sm:$0xff]
        %v273 = vld [vmem:[#allocation8 + $0x70] sm:$0xff]
        %v274 = vld [vmem:[#allocation8 + $0x78] sm:$0xff]
        %v275 = vld [vmem:[#allocation2] sm:$0xff]
        %276 = vmatprep.subr.mxu0 0.0
        %277 = vmatpush1.msra.mxu0 %v274
        %278 = vmatprep.subr.mxu0 0.0
        %279 = vmatpush1.msra.mxu0 %v273
        %280 = vmatprep.subr.mxu0 0.0
        %281 = vmatpush1.msra.mxu0 %v272
        %282 = vmatprep.subr.mxu0 0.0
        %283 = vmatpush1.msra.mxu0 %v271
        %284 = vmatprep.subr.mxu0 0.0
        %285 = vmatpush1.msra.mxu0 %v270
        %286 = vmatprep.subr.mxu0 0.0
        %287 = vmatpush1.msra.mxu0 %v269
        %288 = vmatprep.subr.mxu0 0.0
        %289 = vmatpush1.msra.mxu0 %v268
        %290 = vmatprep.subr.mxu0 0.0
        %291 = vmatpush1.msra.mxu0 %v267
        %292 = vmatprep.subr.mxu0 0.0
        %293 = vmatpush1.msra.mxu0 %v266
        %294 = vmatprep.subr.mxu0 0.0
        %295 = vmatpush1.msra.mxu0 %v265
        %296 = vmatprep.subr.mxu0 0.0
        %297 = vmatpush1.msra.mxu0 %v264
        %298 = vmatprep.subr.mxu0 0.0
        %299 = vmatpush1.msra.mxu0 %v263
        %300 = vmatprep.subr.mxu0 0.0
        %301 = vmatpush1.msra.mxu0 %v262
        %302 = vmatprep.subr.mxu0 0.0
        %303 = vmatpush1.msra.mxu0 %v261
        %304 = vmatprep.subr.mxu0 0.0
        %305 = vmatpush1.msra.mxu0 %v260
        %306 = vmatprep.subr.mxu0 0.0
        %307 = vmatpush1.msra.mxu0 %v259
        %308 = vmatprep.subr.mxu0 0.0
        %309 = vmatpush2.msra.mxu0 0.0
        %310 = vmatprep.subr.mxu0 0.0
        %311 = vmatpush2.msra.mxu0 0.0
        %312 = vmatprep.subr.mxu0 0.0
        %313 = vmatpush2.msra.mxu0 0.0
        %314 = vmatprep.subr.mxu0 0.0
        %315 = vmatpush2.msra.mxu0 0.0
        %316 = vmatprep.subr.mxu0 0.0
        %317 = vmatpush2.msra.mxu0 0.0
        %318 = vmatprep.subr.mxu0 0.0
        %319 = vmatpush2.msra.mxu0 0.0
        %320 = vmatprep.subr.mxu0 0.0
        %321 = vmatpush2.msra.mxu0 0.0
        %322 = vmatprep.subr.mxu0 0.0
        %323 = vmatpush2.msra.mxu0 0.0
        %324 = vmatprep.subr.mxu0 0.0
        %325 = vmatpush2.msra.mxu0 0.0
        %326 = vmatprep.subr.mxu0 0.0
        %327 = vmatpush2.msra.mxu0 0.0
        %328 = vmatprep.subr.mxu0 0.0
        %329 = vmatpush2.msra.mxu0 0.0
        %330 = vmatprep.subr.mxu0 0.0
        %331 = vmatpush2.msra.mxu0 0.0
        %332 = vmatprep.subr.mxu0 0.0
        %333 = vmatpush2.msra.mxu0 0.0
        %334 = vmatprep.subr.mxu0 0.0
        %335 = vmatpush2.msra.mxu0 0.0
        %336 = vmatprep.subr.mxu0 0.0
        %337 = vmatpush2.msra.mxu0 0.0
        %338 = vmatprep.subr.mxu0 0.0
        %339 = vmatpush2.msra.mxu0 0.0
        %340 = vmatprep.mubr.f32.mxu0 0.0
        %341 = vmatmul.mubr.f32.gmra.mxu0 %v258
        %v342 = vpop.f32.mrf.mxu0
        %v343 = vadd.f32 0.0, %v342
        %v344 = vpop.f32.mrf.mxu0
        %345 = vdwg.mxu0
        %v346 = vadd.f32 %v275, %v343
        %347 = vst [vmem:[#allocation2] sm:$0xff] %v346
        // Predicated region
        $region45: #{tpu_custom_call.1} parent=31 // pred_check
          %p348 = pneg %p253
        $region46: #{tpu_custom_call.1} parent=31 // pred_check_branch
          %350 = sbr.rel (%p348) target = $region48
        $region47: #{tpu_custom_call.1} parent=31 // pred_region
          %v351 = vld [vmem:[#allocation2] sm:$0xff]
          %v352 = vld [vmem:[%s252] sm:$0x1]
          %v354 = vlaneseq
          %v355 = vshrl.u32 %v354, 7
          %v356 = vsub.s32 0, %v355
          %v357 = vrot.slane %v352, %v356
          %v359 = vadd.f32 %v351, %v357
          %v360 = vlaneseq
          %v361 = vshrl.u32 %v360, 7
          %s362 = smul.u32 %s28, 8
          %v363 = vstv %s362
          %v364 = vadd.s32 %v361, %v363
          %v365 = vlaneseq
          %v366 = vand.u32 %v365, 127
          %s367 = smul.u32 %s29, 128
          %v368 = vstv %s367
          %v369 = vadd.s32 %v366, %v368
          %v370 = vmul.u32 %v364, 128
          %v371 = vadd.s32 %v370, %v369
          %s372 = sld [smem:[#allocation4]]
          %v373 = vstv %s372
          %v374 = vxor.u32 %v371, %v373
          %v375 = vshrl.u32 %v374, 16
          %v376 = vxor.u32 %v374, %v375
          %v377 = vmul.u32 %v376, 2146121005
          %v378 = vshrl.u32 %v377, 15
          %v379 = vxor.u32 %v377, %v378
          %v380 = vmul.u32 %v379, 2221713035
          %v381 = vshrl.u32 %v380, 16
          %v382 = vxor.u32 %v380, %v381
          %vm383 = vcmp.lt.u32.totalorder %v382, 2147483648
          %v384 = vmul.f32 %v359, 2.0
          %v385 = vsel %vm383, %v384, 0.0
          %386 = vst [vmem:[%s248] sm:$0xff] %v385
        $region48: #{tpu_custom_call.1} parent=31 // pred_fallthru
          _
        %s387 = sand.u32 %s134, 1
        %s388 = scalar_lea.sflag [#allocation7], %s387
        %s389 = sand.u32 %s134, 1
        %s390 = smul.addr %s389, 8
        %s391 = scalar_lea.vmem [#allocation10], %s390
        // Predicated region
        $region49: #{tpu_custom_call.1} parent=31 // pred_check
          %p392 = pneg %p144
        $region50: #{tpu_custom_call.1} parent=31 // pred_check_branch
          %394 = sbr.rel (%p392) target = $region52
        $region51: #{tpu_custom_call.1} parent=31 // pred_region
          %s396 = ssub.s32 128, 128
          %397 = vsyncadd %s388, %s396
          %s398 = sadd.s32 %s29, %s28
          %s399 = smul.addr %s398, 128
          %s400 = scalar_lea.hbm %s4, %s399
          %s402 = sshll.u32 %s391, 4
          %s403 = int_to_ptr.vmem [resolvable:$true] %s402
          %405 = dma.vmem_to_hbm [thread:$0]  %s403, 128, %s400, %s388
        $region52: #{tpu_custom_call.1} parent=31 // pred_fallthru
          _
      $region32: #{tpu_custom_call.1} parent=5 // pred_fallthru
        _
      %p406 = scmp.le.s32.totalorder 2, %s18
      // Predicated region
      $region53: #{tpu_custom_call.1} parent=5 // pred_check
        %p407 = pneg %p406
      $region54: #{tpu_custom_call.1} parent=5 // pred_check_branch
        %409 = sbr.rel (%p407) target = $region56
      $region55: #{tpu_custom_call.1} parent=5 // pred_region
        %s410 = ssub.s32 %s18, 2
        // Predicated region
        $region57: #{tpu_custom_call.1} parent=55 // pred_check
          %p411 = pneg %p150
        $region58: #{tpu_custom_call.1} parent=55 // pred_check_branch
          %413 = sbr.rel (%p411) target = $region60
        $region59: #{tpu_custom_call.1} parent=55 // pred_region
          %s414 = sand.u32 %s135, 1
          %s415 = scalar_lea.sflag [#allocation7], %s414
          %s416 = sand.u32 %s135, 1
          %s417 = smul.addr %s416, 8
          %s418 = scalar_lea.vmem [#allocation10], %s417
          %419 = dma.done %s415, 128
        $region60: #{tpu_custom_call.1} parent=55 // pred_fallthru
          _
      $region56: #{tpu_custom_call.1} parent=5 // pred_fallthru
        _
    $region6: #{tpu_custom_call.1} parent=1 // loop_footer
      %s22 = sadd.s32 1, %s18
    $region7: #{tpu_custom_call.1} parent=1 // loop_footer_branch
      %17 = sbr.rel target = $region3
    $region8: #{tpu_custom_call.1} parent=1 // loop_exit
      _
    %420 = vsyncpa [#allocation6], 1
    %s421 = scalar_lea.sflag [#allocation6], 1
    %422 = vsyncpa %s421, 1
    %423 = vsyncpa [#allocation9], 1
    %424 = vsyncpa [#allocation7], 1
    %s425 = scalar_lea.sflag [#allocation7], 1
    %426 = vsyncpa %s425, 1

</llo_original>
